<compile_context>
chip_gen: v5e
topology: v5e:2x2
jax: 0.10.0
libtpu: 0.0.40
codegen_flags: <defaults>
</compile_context>

<pallas_src>
import functools
import math

import jax
import jax.numpy as jnp
from jax import lax
from jax.experimental import pallas as pl
from jax.experimental.pallas import tpu as pltpu

_MIB = 1024 * 1024

# Contract x (M, K) with weight (N, K) on the K (last) axis of both => (M, N).
# This is x @ W.T without materializing a transpose (pure MXU work).
_DOT_DIMS = (((1,), (1,)), ((), ()))


def _cdiv(a: int, b: int) -> int:
    return -(-a // b)


def _round_up(a: int, b: int) -> int:
    return _cdiv(a, b) * b


def _tpu_config():
    """Best-effort trace-time hardware query (static), with safe fallbacks."""
    vmem_phys = 128 * _MIB
    kind = ""
    try:
        kind = jax.devices()[0].device_kind.lower()
    except Exception:
        pass
    try:
        info = pltpu.get_tpu_info()
        vmem_phys = int(getattr(info, "vmem_capacity_bytes", vmem_phys))
    except Exception:
        pass
    if "v7" in kind:
        vmem_phys = min(vmem_phys, 64 * _MIB)  # 64 MiB per TensorCore on v7x
    two_tc = ("v7" in kind) or (vmem_phys <= 64 * _MIB)
    is_v5 = "v5" in kind
    return vmem_phys, two_tc, is_v5


# ----------------------------- kernels --------------------------------------


def _linear_kernel_single(x_ref, w_ref, o_ref):
    # Whole arrays resident in VMEM; one MXU matmul, f32 accumulation.
    o_ref[...] = lax.dot_general(
        x_ref[...], w_ref[...],
        dimension_numbers=_DOT_DIMS,
        preferred_element_type=jnp.float32,
    ).astype(o_ref.dtype)


def _linear_kernel_tiled(x_ref, w_ref, o_ref, *, last_k, k_rem):
    # x_ref: (tm, tk)  w_ref: (tn, tk)  o_ref: (tm, tn)
    # o_ref's block index is independent of k, so it stays VMEM-resident across
    # the K axis and doubles as the f32 accumulator (no scratch, no finalize).
    k = pl.program_id(2)

    @pl.when(k == 0)
    def _():
        o_ref[...] = jnp.zeros_like(o_ref)

    x = x_ref[...]
    w = w_ref[...]
    if k_rem is not None:
        # K does not divide the K tile: on the last K step zero the out-of-range
        # K columns of BOTH operands (OOB block contents are unspecified, and
        # masking only x could still propagate 0 * inf/nan from w's garbage).
        limit = jnp.where(k == last_k, k_rem, x.shape[1]).astype(jnp.int32)
        x = jnp.where(lax.broadcasted_iota(jnp.int32, x.shape, 1) < limit, x, 0)
        w = jnp.where(lax.broadcasted_iota(jnp.int32, w.shape, 1) < limit, w, 0)

    o_ref[...] += lax.dot_general(
        x, w,
        dimension_numbers=_DOT_DIMS,
        preferred_element_type=jnp.float32,
    ).astype(o_ref.dtype)


# --------------------------- tile selection ----------------------------------


def _select_tiles(M, N, K, vmem_phys, two_tc, tm, tn, tk):
    # Defaults sized so HBM traffic 4*M*N*K*(1/tm + 1/tn) sits above the f32
    # roofline on all generations, while the per-step footprint (~16 MiB)
    # leaves pipelining headroom even inside v7x's 64 MiB VMEM.
    if tm is None:
        tm = 512
    if tn is None:
        tn = 1024
    if tk is None:
        tk = 1024
    # Clamp to the problem size, keeping (8, 128) tile alignment (f32).
    tm = min(tm, _round_up(M, 8))
    tn = min(tn, _round_up(N, 128))
    tk = min(tk, _round_up(K, 128))

    # v7x has 2 TensorCores: guarantee >= 2 tiles on the "parallel" (M, N)
    # grid so the megacore split has work for both cores (prefer splitting N).
    if two_tc and _cdiv(M, tm) * _cdiv(N, tn) < 2:
        if N > 128:
            tn = min(tn, _round_up(_cdiv(N, 2), 128))
        elif M > 8:
            tm = min(tm, _round_up(_cdiv(M, 2), 8))

    def footprint(a, b, c):
        # double-buffered inputs + (conservatively) double-buffered f32 output
        return (2 * (a * c + b * c) + 2 * a * b) * 4

    budget = min((48 if two_tc else 96) * _MIB, int(0.7 * vmem_phys))
    while footprint(tm, tn, tk) > budget and tk > 512:
        tk = _round_up(tk // 2, 128)
    while footprint(tm, tn, tk) > budget and tn > 256:
        tn = _round_up(tn // 2, 128)
    while footprint(tm, tn, tk) > budget and tm > 256:
        tm = _round_up(tm // 2, 8)
    return tm, tn, tk, footprint(tm, tn, tk)


# ------------------------------ wrapper --------------------------------------


@functools.partial(jax.jit, static_argnames=("tm", "tn", "tk", "force_tiled"))
def jvp_linear_forward(x, weight, *, tm=None, tn=None, tk=None,
                       force_tiled=False):
    """x: (M, K) float32, weight: (N, K) float32 -> (M, N) float32 (= x @ W.T)."""
    M, K = x.shape
    N, K2 = weight.shape
    assert K == K2, "in_size mismatch"
    dtype = x.dtype
    itemsize = x.dtype.itemsize

    vmem_phys, two_tc, is_v5 = _tpu_config()
    total_bytes = (M * K + N * K + M * N) * itemsize

    # ---- Small-problem fast path: one gridless call ------------------------
    # Streams each operand from HBM exactly once, zero per-step pipeline
    # overhead, no weight re-fetch.
    fast_cap = min((16 if is_v5 else 24) * _MIB, int(0.3 * vmem_phys))
    if total_bytes <= fast_cap and not force_tiled:
        cost = pl.CostEstimate(flops=2 * M * N * K, transcendentals=0,
                               bytes_accessed=total_bytes)
        return pl.pallas_call(
            _linear_kernel_single,
            out_shape=jax.ShapeDtypeStruct((M, N), dtype),
            compiler_params=pltpu.CompilerParams(
                vmem_limit_bytes=int(min(max(4 * total_bytes, 32 * _MIB),
                                         0.8 * vmem_phys))),
            cost_estimate=cost,
        )(x, weight)

    # ---- Tiled path: large MXU tiles, K-tiled resident accumulator ---------
    tm, tn, tk, fp = _select_tiles(M, N, K, vmem_phys, two_tc, tm, tn, tk)
    gm, gn, gk = _cdiv(M, tm), _cdiv(N, tn), _cdiv(K, tk)
    k_rem = K - (gk - 1) * tk
    kernel = functools.partial(
        _linear_kernel_tiled,
        last_k=gk - 1,
        k_rem=(k_rem if k_rem != tk else None),
    )

    # Advisory cost including the (gm, gn) re-fetch factor of the tiled path.
    cost = pl.CostEstimate(
        flops=2 * M * N * K, transcendentals=0,
        bytes_accessed=(M * K * gn + N * K * gm + M * N) * itemsize)

    vmem_limit = int(min(max(2 * fp, 32 * _MIB), 0.8 * vmem_phys))

    return pl.pallas_call(
        kernel,
        out_shape=jax.ShapeDtypeStruct((M, N), dtype),
        grid_spec=pltpu.PrefetchScalarGridSpec(
            num_scalar_prefetch=0,
            grid=(gm, gn, gk),
            in_specs=[
                pl.BlockSpec((tm, tk), lambda i, j, k: (i, k)),  # x tile
                pl.BlockSpec((tn, tk), lambda i, j, k: (j, k)),  # weight tile
            ],
            out_specs=pl.BlockSpec((tm, tn), lambda i, j, k: (i, j)),
        ),
        compiler_params=pltpu.CompilerParams(
            dimension_semantics=("parallel", "parallel", "arbitrary"),
            vmem_limit_bytes=vmem_limit,
        ),
        cost_estimate=cost,
    )(x, weight)


def init_jvp_linear_params(key, in_size, out_size):
    """Deterministic parameter init mirroring the PyTorch module __init__."""
    # nn.init.kaiming_uniform_(weight, a=sqrt(5)) on an (out, in) matrix:
    # bound = sqrt(6 / ((1 + a^2) * fan_in)) = 1 / sqrt(fan_in)
    bound = 1.0 / math.sqrt(in_size)
    weight = jax.random.uniform(
        key, (out_size, in_size), dtype=jnp.float32, minval=-bound, maxval=bound
    )
    bias = jnp.zeros((out_size,), dtype=jnp.float32)  # unused in forward
    return weight, bias


if __name__ == "__main__":
    key = jax.random.PRNGKey(0)
    k_w, k_x, k_w2, k_x2 = jax.random.split(key, 4)

    # Small shapes consistent with the linear layer: batch=16, in=64, out=128.
    batch, in_size, out_size = 16, 64, 128
    weight, bias = init_jvp_linear_params(k_w, in_size, out_size)
    x = jax.random.normal(k_x, (batch, in_size), dtype=jnp.float32)

    out = jax.block_until_ready(jvp_linear_forward(x, weight))
    ref = x @ weight.T
    assert out.shape == (batch, out_size)
    assert jnp.allclose(out, ref, atol=1e-5, rtol=1e-5)

    # Non-tile-aligned shape forced onto the tiled path to exercise the
    # in-kernel K-remainder mask and edge-tile writeback (no wrapper padding).
    M2, K2, N2 = 500, 1000, 760
    w2 = jax.random.normal(k_w2, (N2, K2), dtype=jnp.float32) * 0.05
    x2 = jax.random.normal(k_x2, (M2, K2), dtype=jnp.float32)
    out2 = jax.block_until_ready(jvp_linear_forward(x2, w2, force_tiled=True))
    ref2 = x2 @ w2.T
    assert out2.shape == (M2, N2)
    assert jnp.allclose(out2, ref2, atol=1e-3, rtol=1e-3)

    # TODO(synk): optional bf16 input/weight storage (f32 MXU accumulation) for
    # HBM-bound shapes is intentionally not enabled to preserve exact f32
    # PyTorch semantics.

    print("KERNEL_OK")
</pallas_src>

<mosaic_0001>
module attributes {stable_mosaic.version = 11 : i64} {
  func.func @_linear_kernel_single(%arg0: memref<16x64xf32, #tpu.memory_space<vmem>>, %arg1: memref<128x64xf32, #tpu.memory_space<vmem>>, %arg2: memref<16x128xf32, #tpu.memory_space<vmem>>) attributes {dimension_semantics = [], scalar_prefetch = 0 : i64, scratch_operands = 0 : i64, tpu.core_type = #tpu.core_type<tc>} {
    %c0 = arith.constant 0 : index
    %c0_0 = arith.constant 0 : index
    %0 = vector.load %arg0[%c0, %c0_0] : memref<16x64xf32, #tpu.memory_space<vmem>>, vector<16x64xf32>
    %c0_1 = arith.constant 0 : index
    %c0_2 = arith.constant 0 : index
    %1 = vector.load %arg1[%c0_1, %c0_2] : memref<128x64xf32, #tpu.memory_space<vmem>>, vector<128x64xf32>
    %cst = arith.constant dense<0.000000e+00> : vector<16x128xf32>
    %2 = tpu.matmul %0, %1, %cst {dimension_numbers = #tpu.dot_dimension_numbers<[1], [1], [0], [0], [0, 0, 1, 0], [], []>} : vector<16x64xf32>, vector<128x64xf32>, vector<16x128xf32> -> vector<16x128xf32>
    %c0_3 = arith.constant 0 : index
    %c0_4 = arith.constant 0 : index
    %3 = vector.load %arg2[%c0_3, %c0_4] : memref<16x128xf32, #tpu.memory_space<vmem>>, vector<16x128xf32>
    tpu.vector_store %arg2[%c0_3, %c0_4], %2 {strides = array<i32>} : memref<16x128xf32, #tpu.memory_space<vmem>>, vector<16x128xf32>,
    return
  }
}

</mosaic_0001>

<llo_original>
// kernel: jvp_linear_forward.1
$region0: #{jvp_linear_forward.1}
  #allocation0 [shape = 'u32[]', space=smem, size = 0x4, offset = 0x4, fixed_abs, tag = 'smem constant byte address 0x4 - core index']
  #allocation1 [shape = 'u32[72,128]{1,0:T(1,128)}', space=vmem, size = 0x9000, scoped, tag = 'internal scratch']
  %s0 = inlined_call_operand.vmem [shape: f32[16,64], index: 0, kind: input, shape index: {}]
  %s1 = inlined_call_operand.vmem [shape: f32[128,64], index: 1, kind: input, shape index: {}]
  %s2 = inlined_call_operand.hbm [shape: f32[16,128], index: 2, kind: output, shape index: {}]
  %s3 = sld [smem:[#allocation0]]
  $region18: #{jvp_linear_forward.1} parent=0
    _
  %s5 = ssub.s32 1, %s3
  %s6 = scalar_select 0, %s5, %s3
  $region1: #{jvp_linear_forward.1} parent=0
    #allocation2 [shape = 'u8[8192]{0}', space=vmem, size = 0x2000, scoped, tag = 'output window, operand 0, single buffered']
    #allocation3 [shape = 's32[1]{0}', space=sflag, size = 0x4, scoped, tag = 'scoped memory for jvp_linear_forward.1']
    %7 = vsyncpa [#allocation3], 0
    // Predicated region
    $region2: #{jvp_linear_forward.1} parent=1 // pred_check
      _
    $region3: #{jvp_linear_forward.1} parent=1 // pred_check_branch
      %9 = sbr.rel (0) target = $region5
    $region4: #{jvp_linear_forward.1} parent=1 // pred_region
      _
    $region5: #{jvp_linear_forward.1} parent=1 // pred_fallthru
      _
    // Predicated region
    $region6: #{jvp_linear_forward.1} parent=1 // pred_check
      _
    $region7: #{jvp_linear_forward.1} parent=1 // pred_check_branch
      %11 = sbr.rel (0) target = $region9
    $region8: #{jvp_linear_forward.1} parent=1 // pred_region
      _
    $region9: #{jvp_linear_forward.1} parent=1 // pred_fallthru
      _
    %v12 = vld [vmem:[%s0] sm:$0xff]
    %v13 = vld [vmem:[%s0 + $0x8] sm:$0xff]
    %v14 = vld [vmem:[%s1] sm:$0xff]
    %v15 = vld [vmem:[%s1 + $0x8] sm:$0xff]
    %v16 = vld [vmem:[%s1 + $0x10] sm:$0xff]
    %v17 = vld [vmem:[%s1 + $0x18] sm:$0xff]
    %v18 = vld [vmem:[%s1 + $0x20] sm:$0xff]
    %v19 = vld [vmem:[%s1 + $0x28] sm:$0xff]
    %v20 = vld [vmem:[%s1 + $0x30] sm:$0xff]
    %v21 = vld [vmem:[%s1 + $0x38] sm:$0xff]
    %v22 = vld [vmem:[%s1 + $0x40] sm:$0xff]
    %v23 = vld [vmem:[%s1 + $0x48] sm:$0xff]
    %v24 = vld [vmem:[%s1 + $0x50] sm:$0xff]
    %v25 = vld [vmem:[%s1 + $0x58] sm:$0xff]
    %v26 = vld [vmem:[%s1 + $0x60] sm:$0xff]
    %v27 = vld [vmem:[%s1 + $0x68] sm:$0xff]
    %v28 = vld [vmem:[%s1 + $0x70] sm:$0xff]
    %v29 = vld [vmem:[%s1 + $0x78] sm:$0xff]
    %vm30 = vcmask 523264
    %v32 = vsel %vm30, %v12, 0
    %v35 = vsel %vm30, %v13, 0
    %v38 = vsel %vm30, %v14, 0
    %v41 = vsel %vm30, %v15, 0
    %v44 = vsel %vm30, %v16, 0
    %v47 = vsel %vm30, %v17, 0
    %v50 = vsel %vm30, %v18, 0
    %v53 = vsel %vm30, %v19, 0
    %v56 = vsel %vm30, %v20, 0
    %v59 = vsel %vm30, %v21, 0
    %v62 = vsel %vm30, %v22, 0
    %v65 = vsel %vm30, %v23, 0
    %v68 = vsel %vm30, %v24, 0
    %v71 = vsel %vm30, %v25, 0
    %v74 = vsel %vm30, %v26, 0
    %v77 = vsel %vm30, %v27, 0
    %v80 = vsel %vm30, %v28, 0
    %v83 = vsel %vm30, %v29, 0
    %85 = vmatpush.xpose.msra.mxu0 %v83
    %86 = vmatpush.xpose.msra.mxu0 %v80
    %87 = vmatpush.xpose.msra.mxu0 %v77
    %88 = vmatpush.xpose.msra.mxu0 %v74
    %89 = vmatpush.xpose.msra.mxu0 %v71
    %90 = vmatpush.xpose.msra.mxu0 %v68
    %91 = vmatpush.xpose.msra.mxu0 %v65
    %92 = vmatpush.xpose.msra.mxu0 %v62
    %93 = vmatpush.xpose.msra.mxu0 %v59
    %94 = vmatpush.xpose.msra.mxu0 %v56
    %95 = vmatpush.xpose.msra.mxu0 %v53
    %96 = vmatpush.xpose.msra.mxu0 %v50
    %97 = vmatpush.xpose.msra.mxu0 %v47
    %98 = vmatpush.xpose.msra.mxu0 %v44
    %99 = vmatpush.xpose.msra.mxu0 %v41
    %100 = vmatpush.xpose.msra.mxu0 %v38
    %101 = vmatmul.f32.gmra.mxu0 %v32
    %v102 = vpop.f32.mrf.mxu0
    %v103 = vadd.f32 0.0, %v102
    %104 = vmatmul.f32.gmra.mxu0 %v35
    %v105 = vpop.f32.mrf.mxu0
    %v106 = vadd.f32 0.0, %v105
    %107 = vdwg.mxu0
    %108 = vst [vmem:[#allocation2] sm:$0xff] %v103
    %109 = vst [vmem:[#allocation2 + $0x8] sm:$0xff] %v106
    // Predicated region
    $region10: #{jvp_linear_forward.1} parent=1 // pred_check
      _
    $region11: #{jvp_linear_forward.1} parent=1 // pred_check_branch
      %111 = sbr.rel (0) target = $region13
    $region12: #{jvp_linear_forward.1} parent=1 // pred_region
      %113 = vsyncadd [#allocation3], 0
      %s114 = sshll.u32 [#allocation2], 4
      %s115 = int_to_ptr.vmem [resolvable:$true] %s114
      %s116 = sshll.u32 %s2, 4
      %s117 = int_to_ptr.hbm [resolvable:$true] %s116
      %122 = dma.vmem_to_hbm [thread:$0]  %s115, 256, %s117, [#allocation3], 128, 128, 8
    $region13: #{jvp_linear_forward.1} parent=1 // pred_fallthru
      _
    // Predicated region
    $region14: #{jvp_linear_forward.1} parent=1 // pred_check
      _
    $region15: #{jvp_linear_forward.1} parent=1 // pred_check_branch
      %124 = sbr.rel (0) target = $region17
    $region16: #{jvp_linear_forward.1} parent=1 // pred_region
      %126 = dma.done [#allocation3], 256
    $region17: #{jvp_linear_forward.1} parent=1 // pred_fallthru
      _
    %127 = vsyncpa [#allocation3], 1

</llo_original>
